<compile_context>
chip_gen: v7x
topology: tpu7x:2x2x1
jax: 0.10.0
libtpu: 0.0.40
codegen_flags: <defaults>
</compile_context>

<pallas_src>
import functools

import jax
import jax.numpy as jnp
import numpy as np
from jax.experimental import pallas as pl
from jax.experimental.pallas import tpu as pltpu


def _round_up(x, m):
    return ((x + m - 1) // m) * m


def _pick_time_chunk(T, cap):
    """Pick Tc (multiple of 8, preferably dividing T) and padded Tp."""
    cap = max(8, (cap // 8) * 8)
    for d in range(min(T, cap), 0, -1):
        if T % d == 0 and d % 8 == 0:
            return d, T, False                     # exact divisor: no masking
    Tc = min(cap, _round_up(T, 8))
    Tp = _round_up(T, Tc)
    return Tc, Tp, Tp != T


# ---------------------------------------------------------------------------
# Generic tiled matmul + bias kernel (hoisted input & output projections).
# bf16 operands on the MXU, f32 accumulation.
# ---------------------------------------------------------------------------
def _matmul_bias_kernel(a_ref, b_ref, bias_ref, o_ref, acc_ref):
    k = pl.program_id(2)

    @pl.when(k == 0)
    def _():
        acc_ref[...] = jnp.zeros_like(acc_ref)

    acc_ref[...] += jnp.dot(a_ref[...], b_ref[...],
                            preferred_element_type=jnp.float32)

    @pl.when(k == pl.num_programs(2) - 1)
    def _():
        o_ref[...] = (acc_ref[...] + bias_ref[...]).astype(o_ref.dtype)


def pallas_matmul_bias(a, b, bias, *, out_dtype=jnp.float32,
                       tm=512, tn=512, tk=512,
                       compute_dtype=jnp.bfloat16):
    """out = a @ b + bias.  a:(M,K)  b:(K,N)  bias:(1,N) or (N,).

    Operands are cast to `compute_dtype` (bf16 by default: MXU-native on
    v5e/v6e/v7x); accumulation is always f32 via preferred_element_type.
    On v5e, tm=tn=256 is a fine alternative; the explicit VMEM limit below
    scales with the chosen tiles either way.
    """
    if compute_dtype is not None:
        a = a.astype(compute_dtype)
        b = b.astype(compute_dtype)
    M, K = a.shape
    K2, N = b.shape
    assert K == K2
    bias = bias.reshape(1, -1).astype(jnp.float32)

    tm = min(tm, _round_up(M, 8))
    tn = min(tn, _round_up(N, 128))
    tk = min(tk, _round_up(K, 128))
    Mp, Kp, Np = _round_up(M, tm), _round_up(K, tk), _round_up(N, tn)

    a_p = jnp.pad(a, ((0, Mp - M), (0, Kp - K)))
    b_p = jnp.pad(b, ((0, Kp - K), (0, Np - N)))
    bias_p = jnp.pad(bias, ((0, 0), (0, Np - N)))

    in_b = jnp.dtype(a_p.dtype).itemsize
    out_b = jnp.dtype(out_dtype).itemsize
    # double-buffered A/B/bias blocks + double-buffered output block
    # + f32 accumulator, plus headroom.
    vmem_limit = int(2 * (tm * tk + tk * tn) * in_b + 2 * tn * 4
                     + 2 * tm * tn * out_b + tm * tn * 4 + (4 << 20))

    out = pl.pallas_call(
        _matmul_bias_kernel,
        out_shape=jax.ShapeDtypeStruct((Mp, Np), out_dtype),
        grid_spec=pltpu.PrefetchScalarGridSpec(
            num_scalar_prefetch=0,
            grid=(Mp // tm, Np // tn, Kp // tk),
            in_specs=[
                pl.BlockSpec((tm, tk), lambda i, j, k: (i, k)),
                pl.BlockSpec((tk, tn), lambda i, j, k: (k, j)),
                pl.BlockSpec((1, tn), lambda i, j, k: (0, j)),
            ],
            out_specs=pl.BlockSpec((tm, tn), lambda i, j, k: (i, j)),
            scratch_shapes=[pltpu.VMEM((tm, tn), jnp.float32)],
        ),
        compiler_params=pltpu.CompilerParams(
            dimension_semantics=("parallel", "parallel", "arbitrary"),
            vmem_limit_bytes=vmem_limit),
    )(a_p, b_p, bias_p)
    return out[:M, :N]


# ---------------------------------------------------------------------------
# Sequential LSTM recurrence.  Per step only h_prev @ W_hh remains; the input
# projection is precomputed.  Grid is chunked over time (Tc steps / grid
# step); h/c carried in VMEM scratch; hs is written BATCH-MAJOR so no
# post-recurrence transpose is needed.
# ---------------------------------------------------------------------------
def _lstm_recurrence_kernel(pre_ref, whh_ref, h0_ref, c0_ref,
                            hs_ref, hT_ref, cT_ref,
                            h_sc, c_sc, *, seq_len, chunk, mask_tail):
    g = pl.program_id(0)

    @pl.when(g == 0)
    def _():
        h_sc[...] = h0_ref[...]
        c_sc[...] = c0_ref[...]

    Hp = h_sc.shape[-1]
    w_hh = whh_ref[...]                       # (Hp, 4*Hp) bf16, VMEM resident

    def step(s, carry):
        h_prev = h_sc[...]
        c_prev = c_sc[...]
        # bf16 MXU operands, f32 accumulation; pre is stored bf16 and widened
        # only for the add.
        gates = pre_ref[s].astype(jnp.float32) + jnp.dot(
            h_prev.astype(w_hh.dtype), w_hh,
            preferred_element_type=jnp.float32)
        # PyTorch gate order i, f, g, o.  Hp is a multiple of 128, so every
        # slice below is a lane-aligned free view (no cross-lane relayout).
        i_g = jax.nn.sigmoid(gates[:, 0 * Hp:1 * Hp])
        f_g = jax.nn.sigmoid(gates[:, 1 * Hp:2 * Hp])
        g_g = jnp.tanh(gates[:, 2 * Hp:3 * Hp])
        c_new = f_g * c_prev + i_g * g_g
        # o-gate computed after c_new so sigmoid(o) interleaves with
        # tanh(c_new) in the single EUP FIFO.
        o_g = jax.nn.sigmoid(gates[:, 3 * Hp:4 * Hp])
        h_new = o_g * jnp.tanh(c_new)
        # Batch-major store: (Bp, 1, Hp) slice of the (Bp, Tc, Hp) block.
        hs_ref[:, pl.ds(s, 1), :] = h_new[:, None, :].astype(hs_ref.dtype)
        if mask_tail:                         # ignore padded tail time steps
            valid = (g * chunk + s) < seq_len
            h_sc[...] = jnp.where(valid, h_new, h_prev)
            c_sc[...] = jnp.where(valid, c_new, c_prev)
        else:
            h_sc[...] = h_new
            c_sc[...] = c_new
        return carry

    jax.lax.fori_loop(0, chunk, step, 0, unroll=True)

    # Final hidden/cell state: written once, on the last grid step only.
    @pl.when(g == pl.num_programs(0) - 1)
    def _():
        hT_ref[...] = h_sc[...]
        cT_ref[...] = c_sc[...]


def decoder_forward(params, x_ids, h0, c0, l=None, *, time_chunk=16):
    """Pallas implementation of Decoder.forward (eval mode, l=None path).

    x_ids : (B, T) int32 token ids
    h0,c0 : (num_layers=1, B, H)
    returns (logits (B, T, V), (hT, cT) each (1, B, H))
    """
    # TODO(synk): pack_padded_sequence / pad_packed_sequence (l is not None)
    # is not implemented; only the l=None path of Decoder.forward is
    # reproduced.  Dropout is a no-op for num_layers=1 / eval mode.
    assert l is None

    emb, w_ih, w_hh, b_sum, w_lin, b_lin = (params["emb"], params["w_ih"],
                                            params["w_hh"], params["b_sum"],
                                            params["w_lin"], params["b_lin"])
    B, T = x_ids.shape
    E = emb.shape[1]
    H = w_hh.shape[0]
    V = w_lin.shape[1]

    # ---- padding for TPU tiles ------------------------------------------
    Hp = _round_up(H, 128)                # lane-align each gate block
    Bp = _round_up(B, 8)                  # sublane alignment
    Tc, Tp, mask_tail = _pick_time_chunk(T, time_chunk)

    def pad_gate_cols(w):                 # (..., 4H) -> (..., 4Hp), per gate
        lead = w.shape[:-1]
        w4 = w.reshape(lead + (4, H))
        w4 = jnp.pad(w4, [(0, 0)] * len(lead) + [(0, 0), (0, Hp - H)])
        return w4.reshape(lead + (4 * Hp,))

    w_ih_p = pad_gate_cols(w_ih)                                   # (E, 4Hp)
    w_hh_p = jnp.pad(pad_gate_cols(w_hh),
                     ((0, Hp - H), (0, 0))).astype(jnp.bfloat16)   # (Hp, 4Hp)
    b_sum_p = pad_gate_cols(b_sum)                                 # (1, 4Hp)
    w_lin_p = jnp.pad(w_lin, ((0, Hp - H), (0, 0)))                # (Hp, V)
    h0_p = jnp.pad(h0[0], ((0, Bp - B), (0, Hp - H)))              # (Bp, Hp)
    c0_p = jnp.pad(c0[0], ((0, Bp - B), (0, Hp - H)))

    # ---- embedding (glue) + hoisted input projection (bf16 MXU) ----------
    # TODO(synk): fuse the gather into the projection via scalar-prefetched
    # ids + pl.Element row gather to avoid materializing (T,B,E) in HBM.
    x_emb = jnp.take(emb, x_ids.T, axis=0)                         # (T, B, E)
    x_emb = jnp.pad(x_emb, ((0, Tp - T), (0, Bp - B), (0, 0)))     # (Tp,Bp,E)
    pre = pallas_matmul_bias(x_emb.reshape(Tp * Bp, E), w_ih_p, b_sum_p,
                             out_dtype=jnp.bfloat16,
                             compute_dtype=jnp.bfloat16)
    pre = pre.reshape(Tp, Bp, 4 * Hp)                              # bf16

    # ---- sequential recurrence -------------------------------------------
    rec_vmem = int(
        2 * (Tc * Bp * 4 * Hp) * 2        # pre chunk (bf16, double buffered)
        + 2 * (Hp * 4 * Hp) * 2           # w_hh (bf16, double buffered)
        + 2 * 2 * (Bp * Hp) * 4           # h0, c0
        + 2 * (Bp * Tc * Hp) * 2          # hs chunk (bf16)
        + 2 * 2 * (Bp * Hp) * 4           # hT, cT
        + 2 * (Bp * Hp) * 4               # h/c scratch
        + (4 << 20))

    kernel = functools.partial(_lstm_recurrence_kernel,
                               seq_len=T, chunk=Tc, mask_tail=mask_tail)

    hs_p, hT_p, cT_p = pl.pallas_call(
        kernel,
        grid_spec=pltpu.PrefetchScalarGridSpec(
            num_scalar_prefetch=0,
            grid=(Tp // Tc,),
            in_specs=[
                pl.BlockSpec((Tc, Bp, 4 * Hp), lambda g: (g, 0, 0)),  # pre
                pl.BlockSpec((Hp, 4 * Hp), lambda g: (0, 0)),         # w_hh
                pl.BlockSpec((Bp, Hp), lambda g: (0, 0)),             # h0
                pl.BlockSpec((Bp, Hp), lambda g: (0, 0)),             # c0
            ],
            out_specs=[
                # hs emitted BATCH-MAJOR: (Bp, Tp, Hp), chunk g along time.
                pl.BlockSpec((Bp, Tc, Hp), lambda g: (0, g, 0)),      # hs
                pl.BlockSpec((Bp, Hp), lambda g: (0, 0)),             # hT
                pl.BlockSpec((Bp, Hp), lambda g: (0, 0)),             # cT
            ],
            scratch_shapes=[pltpu.VMEM((Bp, Hp), jnp.float32),        # h carry
                            pltpu.VMEM((Bp, Hp), jnp.float32)],       # c carry
        ),
        out_shape=(
            jax.ShapeDtypeStruct((Bp, Tp, Hp), jnp.bfloat16),
            jax.ShapeDtypeStruct((Bp, Hp), jnp.float32),
            jax.ShapeDtypeStruct((Bp, Hp), jnp.float32),
        ),
        compiler_params=pltpu.CompilerParams(
            dimension_semantics=("arbitrary",),
            vmem_limit_bytes=rec_vmem),
    )(pre, w_hh_p, h0_p, c0_p)

    # ---- hoisted output projection ----------------------------------------
    # hs is already batch-major: zero-copy reshape straight into one big
    # bf16 matmul; padded batch/time rows carry harmless finite values and
    # are sliced away after the projection.
    # TODO(synk): on v7x, stream this projection per time chunk to overlap
    # with the recurrence on the second TensorCore.
    hs_rows = hs_p.reshape(Bp * Tp, Hp)
    logits = pallas_matmul_bias(hs_rows, w_lin_p, b_lin,
                                out_dtype=jnp.float32,
                                compute_dtype=jnp.bfloat16)
    logits = logits.reshape(Bp, Tp, V)[:B, :T, :]

    hT = hT_p[:B, :H]
    cT = cT_p[:B, :H]
    return logits, (hT[None], cT[None])


def _reference_forward(params, x_ids, h0, c0):
    """Pure-JAX f32 reference of the same forward pass (for verification)."""
    emb, w_ih, w_hh, b_sum, w_lin, b_lin = (params["emb"], params["w_ih"],
                                            params["w_hh"], params["b_sum"],
                                            params["w_lin"], params["b_lin"])
    H = w_hh.shape[0]
    x_emb = jnp.take(emb, x_ids, axis=0)          # (B, T, E)

    def step(carry, x_t):
        h, c = carry
        gates = x_t @ w_ih + h @ w_hh + b_sum[0]
        i = jax.nn.sigmoid(gates[:, 0 * H:1 * H])
        f = jax.nn.sigmoid(gates[:, 1 * H:2 * H])
        g = jnp.tanh(gates[:, 2 * H:3 * H])
        o = jax.nn.sigmoid(gates[:, 3 * H:4 * H])
        c_new = f * c + i * g
        h_new = o * jnp.tanh(c_new)
        return (h_new, c_new), h_new

    (hT, cT), hs = jax.lax.scan(step, (h0[0], c0[0]),
                                jnp.transpose(x_emb, (1, 0, 2)))
    hs = jnp.transpose(hs, (1, 0, 2))             # (B, T, H)
    logits = hs @ w_lin + b_lin[0]
    return logits, (hT[None], cT[None])


def make_params(key, num_embeddings, embedding_dims, hidden_size):
    ks = jax.random.split(key, 7)
    V, E, H = num_embeddings, embedding_dims, hidden_size
    s = 0.1
    return {
        "emb":   s * jax.random.normal(ks[0], (V, E), jnp.float32),
        # stored pre-transposed: (E, 4H) and (H, 4H); gate order i,f,g,o
        "w_ih":  s * jax.random.normal(ks[1], (E, 4 * H), jnp.float32),
        "w_hh":  s * jax.random.normal(ks[2], (H, 4 * H), jnp.float32),
        # combined b_ih + b_hh, kept 2D (1, 4H)
        "b_sum": s * jax.random.normal(ks[3], (1, 4 * H), jnp.float32),
        "w_lin": s * jax.random.normal(ks[4], (H, V), jnp.float32),
        "b_lin": s * jax.random.normal(ks[5], (1, V), jnp.float32),
    }


if __name__ == "__main__":
    num_embeddings = 64
    embedding_dims = 32
    hidden_size = 32
    B, T = 2, 8

    key = jax.random.PRNGKey(0)
    k_par, k_ids, k_h, k_c = jax.random.split(key, 4)

    params = make_params(k_par, num_embeddings, embedding_dims, hidden_size)
    x_ids = jax.random.randint(k_ids, (B, T), 0, num_embeddings, dtype=jnp.int32)
    h0 = jax.random.normal(k_h, (1, B, hidden_size), jnp.float32)
    c0 = jax.random.normal(k_c, (1, B, hidden_size), jnp.float32)

    logits, (hT, cT) = decoder_forward(params, x_ids, h0, c0)
    jax.block_until_ready((logits, hT, cT))

    # bf16 MXU operands with f32 accumulation: compare against the f32
    # reference with relaxed tolerances.
    ref_logits, (ref_hT, ref_cT) = _reference_forward(params, x_ids, h0, c0)
    np.testing.assert_allclose(np.asarray(logits), np.asarray(ref_logits),
                               rtol=2e-2, atol=2e-2)
    np.testing.assert_allclose(np.asarray(hT), np.asarray(ref_hT),
                               rtol=2e-2, atol=2e-2)
    np.testing.assert_allclose(np.asarray(cT), np.asarray(ref_cT),
                               rtol=2e-2, atol=2e-2)

    print("KERNEL_OK")
</pallas_src>

<mosaic_0001>
module attributes {stable_mosaic.version = 11 : i64} {
  func.func @_matmul_bias_kernel(%arg0: i32, %arg1: i32, %arg2: i32, %arg3: memref<64x128xbf16, #tpu.memory_space<vmem>>, %arg4: memref<128x512xbf16, #tpu.memory_space<vmem>>, %arg5: memref<1x512xf32, #tpu.memory_space<vmem>>, %arg6: memref<64x512xbf16, #tpu.memory_space<vmem>>, %arg7: memref<64x512xf32, #tpu.memory_space<vmem>>) attributes {dimension_semantics = [#tpu.dimension_semantics<parallel>, #tpu.dimension_semantics<parallel>, #tpu.dimension_semantics<arbitrary>], iteration_bounds = array<i64: 1, 1, 1>, scalar_prefetch = 0 : i64, scratch_operands = 1 : i64, tpu.core_type = #tpu.core_type<tc>, window_params = [{transform_indices = @transform_0, window_bounds = array<i64: 64, 128>}, {transform_indices = @transform_1, window_bounds = array<i64: 128, 512>}, {transform_indices = @transform_2, window_bounds = array<i64: 1, 512>}, {transform_indices = @transform_3, window_bounds = array<i64: 64, 512>}]} {
    %c0_i32 = arith.constant 0 : i32
    %0 = arith.cmpi eq, %arg2, %c0_i32 : i32
    %1 = arith.extui %0 : i1 to i32
    %c0_i32_0 = arith.constant 0 : i32
    %2 = arith.cmpi ne, %1, %c0_i32_0 : i32
    scf.if %2 {
      %cst_10 = arith.constant 0.000000e+00 : f32
      %12 = vector.broadcast %cst_10 : f32 to vector<64x512xf32>
      %c0_11 = arith.constant 0 : index
      %c0_12 = arith.constant 0 : index
      %13 = vector.load %arg7[%c0_11, %c0_12] : memref<64x512xf32, #tpu.memory_space<vmem>>, vector<64x512xf32>
      tpu.vector_store %arg7[%c0_11, %c0_12], %12 {strides = array<i32>} : memref<64x512xf32, #tpu.memory_space<vmem>>, vector<64x512xf32>,
    } else {
    }
    %c0 = arith.constant 0 : index
    %c0_1 = arith.constant 0 : index
    %3 = vector.load %arg7[%c0, %c0_1] : memref<64x512xf32, #tpu.memory_space<vmem>>, vector<64x512xf32>
    %c0_2 = arith.constant 0 : index
    %c0_3 = arith.constant 0 : index
    %4 = vector.load %arg3[%c0_2, %c0_3] : memref<64x128xbf16, #tpu.memory_space<vmem>>, vector<64x128xbf16>
    %c0_4 = arith.constant 0 : index
    %c0_5 = arith.constant 0 : index
    %5 = vector.load %arg4[%c0_4, %c0_5] : memref<128x512xbf16, #tpu.memory_space<vmem>>, vector<128x512xbf16>
    %cst = arith.constant dense<0.000000e+00> : vector<64x512xf32>
    %6 = tpu.matmul %4, %5, %cst {dimension_numbers = #tpu.dot_dimension_numbers<[1], [0], [0], [1], [0, 0, 1, 1], [], []>} : vector<64x128xbf16>, vector<128x512xbf16>, vector<64x512xf32> -> vector<64x512xf32>
    %7 = arith.addf %3, %6 : vector<64x512xf32>
    %c0_6 = arith.constant 0 : index
    %c0_7 = arith.constant 0 : index
    %8 = vector.load %arg7[%c0_6, %c0_7] : memref<64x512xf32, #tpu.memory_space<vmem>>, vector<64x512xf32>
    tpu.vector_store %arg7[%c0_6, %c0_7], %7 {strides = array<i32>} : memref<64x512xf32, #tpu.memory_space<vmem>>, vector<64x512xf32>,
    %c0_i32_8 = arith.constant 0 : i32
    %9 = arith.cmpi eq, %arg2, %c0_i32_8 : i32
    %10 = arith.extui %9 : i1 to i32
    %c0_i32_9 = arith.constant 0 : i32
    %11 = arith.cmpi ne, %10, %c0_i32_9 : i32
    scf.if %11 {
      %c0_10 = arith.constant 0 : index
      %c0_11 = arith.constant 0 : index
      %12 = vector.load %arg7[%c0_10, %c0_11] : memref<64x512xf32, #tpu.memory_space<vmem>>, vector<64x512xf32>
      %c0_12 = arith.constant 0 : index
      %c0_13 = arith.constant 0 : index
      %13 = vector.load %arg5[%c0_12, %c0_13] : memref<1x512xf32, #tpu.memory_space<vmem>>, vector<1x512xf32>
      %14 = vector.broadcast %13 : vector<1x512xf32> to vector<64x512xf32>
      %15 = arith.addf %12, %14 : vector<64x512xf32>
      %16 = arith.truncf %15 : vector<64x512xf32> to vector<64x512xbf16>
      %c0_14 = arith.constant 0 : index
      %c0_15 = arith.constant 0 : index
      %17 = vector.load %arg6[%c0_14, %c0_15] : memref<64x512xbf16, #tpu.memory_space<vmem>>, vector<64x512xbf16>
      tpu.vector_store %arg6[%c0_14, %c0_15], %16 {strides = array<i32>} : memref<64x512xbf16, #tpu.memory_space<vmem>>, vector<64x512xbf16>,
    } else {
    }
    return
  }
  func.func @transform_0(%arg0: i32, %arg1: i32, %arg2: i32) -> (i32, i32) {
    %c0_i32 = arith.constant 0 : i32
    return %arg0, %arg2 : i32, i32
  }
  func.func @transform_1(%arg0: i32, %arg1: i32, %arg2: i32) -> (i32, i32) {
    %c0_i32 = arith.constant 0 : i32
    return %arg2, %arg1 : i32, i32
  }
  func.func @transform_2(%arg0: i32, %arg1: i32, %arg2: i32) -> (i32, i32) {
    %c0_i32 = arith.constant 0 : i32
    %c0_i32_0 = arith.constant 0 : i32
    return %c0_i32, %arg1 : i32, i32
  }
  func.func @transform_3(%arg0: i32, %arg1: i32, %arg2: i32) -> (i32, i32) {
    %c0_i32 = arith.constant 0 : i32
    return %arg0, %arg1 : i32, i32
  }
}

</mosaic_0001>

<llo_original>
// kernel: tpu_custom_call.1
$region0: #{tpu_custom_call.1}
  #allocation0 [shape = 'u32[]', space=smem, size = 0x4, offset = 0x4, fixed_abs, tag = 'smem constant byte address 0x4 - core index']
  #allocation1 [shape = 'u32[144,128]{1,0:T(1,128)}', space=vmem, size = 0x12000, scoped, tag = 'internal scratch']
  #allocation2 [shape = 'f32[64,512]{1,0:T(8,128)}', space=vmem, size = 0x20000, scoped, tag = 'scratch operand']
  %s0 = inlined_call_operand.hbm [shape: bf16[64,128], index: 0, kind: input, shape index: {}]
  %s1 = inlined_call_operand.hbm [shape: bf16[128,512], index: 1, kind: input, shape index: {}]
  %s2 = inlined_call_operand.vmem [shape: f32[1,512], index: 2, kind: input, shape index: {}]
  %s3 = inlined_call_operand.hbm [shape: bf16[64,512], index: 3, kind: output, shape index: {}]
  %s4 = sld [smem:[#allocation0]]
  $region38: #{tpu_custom_call.1} parent=0
    _
  %s6 = ssub.s32 1, %s4
  %s7 = scalar_select 0, %s6, %s4
  $region1: #{tpu_custom_call.1} parent=0
    #allocation3 [shape = 'u8[16384]{0}', space=vmem, size = 0x4000, scoped, tag = 'input window, operand 0, single buffered']
    #allocation4 [shape = 's32[1]{0}', space=sflag, size = 0x4, scoped, tag = 'scoped memory for tpu_custom_call.1']
    #allocation5 [shape = 's32[1]{0}', space=sflag, size = 0x4, scoped, tag = 'scoped memory for tpu_custom_call.1']
    #allocation6 [shape = 'u8[131072]{0}', space=vmem, size = 0x20000, scoped, tag = 'input window, operand 1, single buffered']
    #allocation7 [shape = 's32[1]{0}', space=sflag, size = 0x4, scoped, tag = 'scoped memory for tpu_custom_call.1']
    #allocation8 [shape = 'u8[65536]{0}', space=vmem, size = 0x10000, scoped, tag = 'output window, operand 0, single buffered']
    %8 = vsyncpa [#allocation4], 0
    %9 = vsyncpa [#allocation7], 0
    %10 = vsyncpa [#allocation5], 0
    // Predicated region
    $region2: #{tpu_custom_call.1} parent=1 // pred_check
      _
    $region3: #{tpu_custom_call.1} parent=1 // pred_check_branch
      %12 = sbr.rel (0) target = $region5
    $region4: #{tpu_custom_call.1} parent=1 // pred_region
      %s14 = ssub.s32 512, 512
      %15 = vsyncadd [#allocation4], %s14
      %s16 = sshll.u32 [#allocation3], 4
      %s17 = int_to_ptr.vmem [resolvable:$true] %s16
      %22 = dma.hbm_to_vmem [thread:$0]  %s0, 512, %s17, [#allocation4], 64, 64, 4
    $region5: #{tpu_custom_call.1} parent=1 // pred_fallthru
      _
    // Predicated region
    $region6: #{tpu_custom_call.1} parent=1 // pred_check
      _
    $region7: #{tpu_custom_call.1} parent=1 // pred_check_branch
      %24 = sbr.rel (0) target = $region9
    $region8: #{tpu_custom_call.1} parent=1 // pred_region
      %s26 = ssub.s32 4096, 4096
      %27 = vsyncadd [#allocation7], %s26
      %s28 = sshll.u32 [#allocation6], 4
      %s29 = int_to_ptr.vmem [resolvable:$true] %s28
      %34 = dma.hbm_to_vmem [thread:$0]  %s1, 4096, %s29, [#allocation7], 256, 256, 16
    $region9: #{tpu_custom_call.1} parent=1 // pred_fallthru
      _
    // Predicated region
    $region10: #{tpu_custom_call.1} parent=1 // pred_check
      _
    $region11: #{tpu_custom_call.1} parent=1 // pred_check_branch
      %36 = sbr.rel (0) target = $region13
    $region12: #{tpu_custom_call.1} parent=1 // pred_region
      _
    $region13: #{tpu_custom_call.1} parent=1 // pred_fallthru
      _
    // Predicated region
    $region14: #{tpu_custom_call.1} parent=1 // pred_check
      _
    $region15: #{tpu_custom_call.1} parent=1 // pred_check_branch
      %38 = sbr.rel (0) target = $region17
    $region16: #{tpu_custom_call.1} parent=1 // pred_region
      %39 = dma.done [#allocation4], 512
    $region17: #{tpu_custom_call.1} parent=1 // pred_fallthru
      _
    // Predicated region
    $region18: #{tpu_custom_call.1} parent=1 // pred_check
      _
    $region19: #{tpu_custom_call.1} parent=1 // pred_check_branch
      %41 = sbr.rel (0) target = $region21
    $region20: #{tpu_custom_call.1} parent=1 // pred_region
      %42 = dma.done [#allocation7], 4096
    $region21: #{tpu_custom_call.1} parent=1 // pred_fallthru
      _
    %p44 = scmp.eq.s32.totalorder 0, 0
    // Predicated region
    $region22: #{tpu_custom_call.1} parent=1 // pred_check
      %p45 = pneg %p44
    $region23: #{tpu_custom_call.1} parent=1 // pred_check_branch
      %47 = sbr.rel (%p45) target = $region25
    $region24: #{tpu_custom_call.1} parent=1 // pred_region
      %48 = vst [vmem:[#allocation2] sm:$0xff] 0.0
      %49 = vst [vmem:[#allocation2 + $0x8] sm:$0xff] 0.0
      %50 = vst [vmem:[#allocation2 + $0x10] sm:$0xff] 0.0
      %51 = vst [vmem:[#allocation2 + $0x18] sm:$0xff] 0.0
      %52 = vst [vmem:[#allocation2 + $0x20] sm:$0xff] 0.0
      %53 = vst [vmem:[#allocation2 + $0x28] sm:$0xff] 0.0
      %54 = vst [vmem:[#allocation2 + $0x30] sm:$0xff] 0.0
      %55 = vst [vmem:[#allocation2 + $0x38] sm:$0xff] 0.0
      %56 = vst [vmem:[#allocation2 + $0x40] sm:$0xff] 0.0
      %57 = vst [vmem:[#allocation2 + $0x48] sm:$0xff] 0.0
      %58 = vst [vmem:[#allocation2 + $0x50] sm:$0xff] 0.0
      %59 = vst [vmem:[#allocation2 + $0x58] sm:$0xff] 0.0
      %60 = vst [vmem:[#allocation2 + $0x60] sm:$0xff] 0.0
      %61 = vst [vmem:[#allocation2 + $0x68] sm:$0xff] 0.0
      %62 = vst [vmem:[#allocation2 + $0x70] sm:$0xff] 0.0
      %63 = vst [vmem:[#allocation2 + $0x78] sm:$0xff] 0.0
      %64 = vst [vmem:[#allocation2 + $0x80] sm:$0xff] 0.0
      %65 = vst [vmem:[#allocation2 + $0x88] sm:$0xff] 0.0
      %66 = vst [vmem:[#allocation2 + $0x90] sm:$0xff] 0.0
      %67 = vst [vmem:[#allocation2 + $0x98] sm:$0xff] 0.0
      %68 = vst [vmem:[#allocation2 + $0xa0] sm:$0xff] 0.0
      %69 = vst [vmem:[#allocation2 + $0xa8] sm:$0xff] 0.0
      %70 = vst [vmem:[#allocation2 + $0xb0] sm:$0xff] 0.0
      %71 = vst [vmem:[#allocation2 + $0xb8] sm:$0xff] 0.0
      %72 = vst [vmem:[#allocation2 + $0xc0] sm:$0xff] 0.0
      %73 = vst [vmem:[#allocation2 + $0xc8] sm:$0xff] 0.0
      %74 = vst [vmem:[#allocation2 + $0xd0] sm:$0xff] 0.0
      %75 = vst [vmem:[#allocation2 + $0xd8] sm:$0xff] 0.0
      %76 = vst [vmem:[#allocation2 + $0xe0] sm:$0xff] 0.0
      %77 = vst [vmem:[#allocation2 + $0xe8] sm:$0xff] 0.0
      %78 = vst [vmem:[#allocation2 + $0xf0] sm:$0xff] 0.0
      %79 = vst [vmem:[#allocation2 + $0xf8] sm:$0xff] 0.0
    $region25: #{tpu_custom_call.1} parent=1 // pred_fallthru
      _
    %v80 = vld [vmem:[#allocation2] sm:$0xff]
    %v81 = vld [vmem:[#allocation2 + $0x8] sm:$0xff]
    %v82 = vld [vmem:[#allocation2 + $0x10] sm:$0xff]
    %v83 = vld [vmem:[#allocation2 + $0x18] sm:$0xff]
    %v84 = vld [vmem:[#allocation2 + $0x20] sm:$0xff]
    %v85 = vld [vmem:[#allocation2 + $0x28] sm:$0xff]
    %v86 = vld [vmem:[#allocation2 + $0x30] sm:$0xff]
    %v87 = vld [vmem:[#allocation2 + $0x38] sm:$0xff]
    %v88 = vld [vmem:[#allocation2 + $0x40] sm:$0xff]
    %v89 = vld [vmem:[#allocation2 + $0x48] sm:$0xff]
    %v90 = vld [vmem:[#allocation2 + $0x50] sm:$0xff]
    %v91 = vld [vmem:[#allocation2 + $0x58] sm:$0xff]
    %v92 = vld [vmem:[#allocation2 + $0x60] sm:$0xff]
    %v93 = vld [vmem:[#allocation2 + $0x68] sm:$0xff]
    %v94 = vld [vmem:[#allocation2 + $0x70] sm:$0xff]
    %v95 = vld [vmem:[#allocation2 + $0x78] sm:$0xff]
    %v96 = vld [vmem:[#allocation2 + $0x80] sm:$0xff]
    %v97 = vld [vmem:[#allocation2 + $0x88] sm:$0xff]
    %v98 = vld [vmem:[#allocation2 + $0x90] sm:$0xff]
    %v99 = vld [vmem:[#allocation2 + $0x98] sm:$0xff]
    %v100 = vld [vmem:[#allocation2 + $0xa0] sm:$0xff]
    %v101 = vld [vmem:[#allocation2 + $0xa8] sm:$0xff]
    %v102 = vld [vmem:[#allocation2 + $0xb0] sm:$0xff]
    %v103 = vld [vmem:[#allocation2 + $0xb8] sm:$0xff]
    %v104 = vld [vmem:[#allocation2 + $0xc0] sm:$0xff]
    %v105 = vld [vmem:[#allocation2 + $0xc8] sm:$0xff]
    %v106 = vld [vmem:[#allocation2 + $0xd0] sm:$0xff]
    %v107 = vld [vmem:[#allocation2 + $0xd8] sm:$0xff]
    %v108 = vld [vmem:[#allocation2 + $0xe0] sm:$0xff]
    %v109 = vld [vmem:[#allocation2 + $0xe8] sm:$0xff]
    %v110 = vld [vmem:[#allocation2 + $0xf0] sm:$0xff]
    %v111 = vld [vmem:[#allocation2 + $0xf8] sm:$0xff]
    %v112 = vld [vmem:[#allocation3] sm:$0xf]
    %v113 = vld [vmem:[#allocation3 + $0x4] sm:$0xf]
    %v114 = vld [vmem:[#allocation3 + $0x8] sm:$0xf]
    %v115 = vld [vmem:[#allocation3 + $0xc] sm:$0xf]
    %v116 = vld [vmem:[#allocation3 + $0x10] sm:$0xf]
    %v117 = vld [vmem:[#allocation3 + $0x14] sm:$0xf]
    %v118 = vld [vmem:[#allocation3 + $0x18] sm:$0xf]
    %v119 = vld [vmem:[#allocation3 + $0x1c] sm:$0xf]
    %v120 = vld [vmem:[#allocation6] sm:$0xff]
    %v121 = vld [vmem:[#allocation6 + $0x8] sm:$0xff]
    %v122 = vld [vmem:[#allocation6 + $0x10] sm:$0xff]
    %v123 = vld [vmem:[#allocation6 + $0x18] sm:$0xff]
    %v124 = vld [vmem:[#allocation6 + $0x20] sm:$0xff]
    %v125 = vld [vmem:[#allocation6 + $0x28] sm:$0xff]
    %v126 = vld [vmem:[#allocation6 + $0x30] sm:$0xff]
    %v127 = vld [vmem:[#allocation6 + $0x38] sm:$0xff]
    %v128 = vld [vmem:[#allocation6 + $0x40] sm:$0xff]
    %v129 = vld [vmem:[#allocation6 + $0x48] sm:$0xff]
    %v130 = vld [vmem:[#allocation6 + $0x50] sm:$0xff]
    %v131 = vld [vmem:[#allocation6 + $0x58] sm:$0xff]
    %v132 = vld [vmem:[#allocation6 + $0x60] sm:$0xff]
    %v133 = vld [vmem:[#allocation6 + $0x68] sm:$0xff]
    %v134 = vld [vmem:[#allocation6 + $0x70] sm:$0xff]
    %v135 = vld [vmem:[#allocation6 + $0x78] sm:$0xff]
    %v136 = vld [vmem:[#allocation6 + $0x80] sm:$0xff]
    %v137 = vld [vmem:[#allocation6 + $0x88] sm:$0xff]
    %v138 = vld [vmem:[#allocation6 + $0x90] sm:$0xff]
    %v139 = vld [vmem:[#allocation6 + $0x98] sm:$0xff]
    %v140 = vld [vmem:[#allocation6 + $0xa0] sm:$0xff]
    %v141 = vld [vmem:[#allocation6 + $0xa8] sm:$0xff]
    %v142 = vld [vmem:[#allocation6 + $0xb0] sm:$0xff]
    %v143 = vld [vmem:[#allocation6 + $0xb8] sm:$0xff]
    %v144 = vld [vmem:[#allocation6 + $0xc0] sm:$0xff]
    %v145 = vld [vmem:[#allocation6 + $0xc8] sm:$0xff]
    %v146 = vld [vmem:[#allocation6 + $0xd0] sm:$0xff]
    %v147 = vld [vmem:[#allocation6 + $0xd8] sm:$0xff]
    %v148 = vld [vmem:[#allocation6 + $0xe0] sm:$0xff]
    %v149 = vld [vmem:[#allocation6 + $0xe8] sm:$0xff]
    %v150 = vld [vmem:[#allocation6 + $0xf0] sm:$0xff]
    %v151 = vld [vmem:[#allocation6 + $0xf8] sm:$0xff]
    %v160 = vunpack.c.l.b16 %v112
    %v161 = vunpack.c.l.b16 %v113
    %v162 = vunpack.c.l.b16 %v114
    %v163 = vunpack.c.l.b16 %v115
    %v164 = vunpack.c.l.b16 %v116
    %v165 = vunpack.c.l.b16 %v117
    %v166 = vunpack.c.l.b16 %v118
    %v167 = vunpack.c.l.b16 %v119
    %v168 = vpack.c.b16 %v161, %v160
    %v169 = vpack.c.b16 %v163, %v162
    %v170 = vpack.c.b16 %v165, %v164
    %v171 = vpack.c.b16 %v167, %v166
    %v208 = vunpack.c.l.b16 %v120
    %v209 = vunpack.c.h.b16 %v120
    %v210 = vunpack.c.l.b16 %v121
    %v211 = vunpack.c.h.b16 %v121
    %v212 = vunpack.c.l.b16 %v122
    %v213 = vunpack.c.h.b16 %v122
    %v214 = vunpack.c.l.b16 %v123
    %v215 = vunpack.c.h.b16 %v123
    %v216 = vunpack.c.l.b16 %v124
    %v217 = vunpack.c.h.b16 %v124
    %v218 = vunpack.c.l.b16 %v125
    %v219 = vunpack.c.h.b16 %v125
    %v220 = vunpack.c.l.b16 %v126
    %v221 = vunpack.c.h.b16 %v126
    %v222 = vunpack.c.l.b16 %v127
    %v223 = vunpack.c.h.b16 %v127
    %v224 = vunpack.c.l.b16 %v128
    %v225 = vunpack.c.h.b16 %v128
    %v226 = vunpack.c.l.b16 %v129
    %v227 = vunpack.c.h.b16 %v129
    %v228 = vunpack.c.l.b16 %v130
    %v229 = vunpack.c.h.b16 %v130
    %v230 = vunpack.c.l.b16 %v131
    %v231 = vunpack.c.h.b16 %v131
    %v232 = vunpack.c.l.b16 %v132
    %v233 = vunpack.c.h.b16 %v132
    %v234 = vunpack.c.l.b16 %v133
    %v235 = vunpack.c.h.b16 %v133
    %v236 = vunpack.c.l.b16 %v134
    %v237 = vunpack.c.h.b16 %v134
    %v238 = vunpack.c.l.b16 %v135
    %v239 = vunpack.c.h.b16 %v135
    %v240 = vunpack.c.l.b16 %v136
    %v241 = vunpack.c.h.b16 %v136
    %v242 = vunpack.c.l.b16 %v137
    %v243 = vunpack.c.h.b16 %v137
    %v244 = vunpack.c.l.b16 %v138
    %v245 = vunpack.c.h.b16 %v138
    %v246 = vunpack.c.l.b16 %v139
    %v247 = vunpack.c.h.b16 %v139
    %v248 = vunpack.c.l.b16 %v140
    %v249 = vunpack.c.h.b16 %v140
    %v250 = vunpack.c.l.b16 %v141
    %v251 = vunpack.c.h.b16 %v141
    %v252 = vunpack.c.l.b16 %v142
    %v253 = vunpack.c.h.b16 %v142
    %v254 = vunpack.c.l.b16 %v143
    %v255 = vunpack.c.h.b16 %v143
    %v256 = vunpack.c.l.b16 %v144
    %v257 = vunpack.c.h.b16 %v144
    %v258 = vunpack.c.l.b16 %v145
    %v259 = vunpack.c.h.b16 %v145
    %v260 = vunpack.c.l.b16 %v146
    %v261 = vunpack.c.h.b16 %v146
    %v262 = vunpack.c.l.b16 %v147
    %v263 = vunpack.c.h.b16 %v147
    %v264 = vunpack.c.l.b16 %v148
    %v265 = vunpack.c.h.b16 %v148
    %v266 = vunpack.c.l.b16 %v149
    %v267 = vunpack.c.h.b16 %v149
    %v268 = vunpack.c.l.b16 %v150
    %v269 = vunpack.c.h.b16 %v150
    %v270 = vunpack.c.l.b16 %v151
    %v271 = vunpack.c.h.b16 %v151
    %v272 = vpack.c.b16 %v212, %v208
    %v273 = vpack.c.b16 %v213, %v209
    %v274 = vpack.c.b16 %v214, %v210
    %v275 = vpack.c.b16 %v215, %v211
    %v276 = vpack.c.b16 %v220, %v216
    %v277 = vpack.c.b16 %v221, %v217
    %v278 = vpack.c.b16 %v222, %v218
    %v279 = vpack.c.b16 %v223, %v219
    %v280 = vpack.c.b16 %v228, %v224
    %v281 = vpack.c.b16 %v229, %v225
    %v282 = vpack.c.b16 %v230, %v226
    %v283 = vpack.c.b16 %v231, %v227
    %v284 = vpack.c.b16 %v236, %v232
    %v285 = vpack.c.b16 %v237, %v233
    %v286 = vpack.c.b16 %v238, %v234
    %v287 = vpack.c.b16 %v239, %v235
    %v288 = vpack.c.b16 %v244, %v240
    %v289 = vpack.c.b16 %v245, %v241
    %v290 = vpack.c.b16 %v246, %v242
    %v291 = vpack.c.b16 %v247, %v243
    %v292 = vpack.c.b16 %v252, %v248
    %v293 = vpack.c.b16 %v253, %v249
    %v294 = vpack.c.b16 %v254, %v250
    %v295 = vpack.c.b16 %v255, %v251
    %v296 = vpack.c.b16 %v260, %v256
    %v297 = vpack.c.b16 %v261, %v257
    %v298 = vpack.c.b16 %v262, %v258
    %v299 = vpack.c.b16 %v263, %v259
    %v300 = vpack.c.b16 %v268, %v264
    %v301 = vpack.c.b16 %v269, %v265
    %v302 = vpack.c.b16 %v270, %v266
    %v303 = vpack.c.b16 %v271, %v267
    %336 = vmatprep.subr.bf16.mxu0 %v273
    %337 = vmatpush1.bf16.msra.mxu0 %v272
    %338 = vmatprep.subr.bf16.mxu0 %v277
    %339 = vmatpush1.bf16.msra.mxu0 %v276
    %340 = vmatprep.subr.bf16.mxu0 %v281
    %341 = vmatpush1.bf16.msra.mxu0 %v280
    %342 = vmatprep.subr.bf16.mxu0 %v285
    %343 = vmatpush1.bf16.msra.mxu0 %v284
    %344 = vmatprep.subr.bf16.mxu0 %v289
    %345 = vmatpush1.bf16.msra.mxu0 %v288
    %346 = vmatprep.subr.bf16.mxu0 %v293
    %347 = vmatpush1.bf16.msra.mxu0 %v292
    %348 = vmatprep.subr.bf16.mxu0 %v297
    %349 = vmatpush1.bf16.msra.mxu0 %v296
    %350 = vmatprep.subr.bf16.mxu0 %v301
    %351 = vmatpush1.bf16.msra.mxu0 %v300
    %352 = vmatprep.subr.bf16.mxu0 0
    %353 = vmatpush1.bf16.msra.mxu0 0
    %354 = vmatprep.subr.bf16.mxu0 0
    %355 = vmatpush1.bf16.msra.mxu0 0
    %356 = vmatprep.subr.bf16.mxu0 0
    %357 = vmatpush1.bf16.msra.mxu0 0
    %358 = vmatprep.subr.bf16.mxu0 0
    %359 = vmatpush1.bf16.msra.mxu0 0
    %360 = vmatprep.subr.bf16.mxu0 0
    %361 = vmatpush1.bf16.msra.mxu0 0
    %362 = vmatprep.subr.bf16.mxu0 0
    %363 = vmatpush1.bf16.msra.mxu0 0
    %364 = vmatprep.subr.bf16.mxu0 0
    %365 = vmatpush1.bf16.msra.mxu0 0
    %366 = vmatprep.subr.bf16.mxu0 0
    %367 = vmatpush1.bf16.msra.mxu0 0
    %368 = vmatprep.mubr.bf16.mxu0 0
    %369 = vmatmul.mubr.bf16.gmra.mrb[0].mxu0 %v168
    %v370 = vpop.f32.mrb[0].mxu0
    %v371 = vadd.f32 0.0, %v370
    %v372 = vpop.f32.mrb[0].mxu0
    %v373 = vadd.f32 0.0, %v372
    %v374 = vpop.f32.mrb[0].mxu0
    %v375 = vadd.f32 0.0, %v374
    %v376 = vpop.f32.mrb[0].mxu0
    %v377 = vadd.f32 0.0, %v376
    %378 = vmatprep.mubr.bf16.mxu0 0
    %379 = vmatmul.mubr.bf16.gmra.mrb[0].mxu0 %v169
    %v380 = vpop.f32.mrb[0].mxu0
    %v381 = vadd.f32 0.0, %v380
    %v382 = vpop.f32.mrb[0].mxu0
    %v383 = vadd.f32 0.0, %v382
    %v384 = vpop.f32.mrb[0].mxu0
    %v385 = vadd.f32 0.0, %v384
    %v386 = vpop.f32.mrb[0].mxu0
    %v387 = vadd.f32 0.0, %v386
    %388 = vmatprep.mubr.bf16.mxu0 0
    %389 = vmatmul.mubr.bf16.gmra.mrb[0].mxu0 %v170
    %v390 = vpop.f32.mrb[0].mxu0
    %v391 = vadd.f32 0.0, %v390
    %v392 = vpop.f32.mrb[0].mxu0
    %v393 = vadd.f32 0.0, %v392
    %v394 = vpop.f32.mrb[0].mxu0
    %v395 = vadd.f32 0.0, %v394
    %v396 = vpop.f32.mrb[0].mxu0
    %v397 = vadd.f32 0.0, %v396
    %398 = vmatprep.mubr.bf16.mxu0 0
    %399 = vmatmul.mubr.bf16.gmra.mrb[0].mxu0 %v171
    %v400 = vpop.f32.mrb[0].mxu0
    %v401 = vadd.f32 0.0, %v400
    %v402 = vpop.f32.mrb[0].mxu0
    %v403 = vadd.f32 0.0, %v402
    %v404 = vpop.f32.mrb[0].mxu0
    %v405 = vadd.f32 0.0, %v404
    %v406 = vpop.f32.mrb[0].mxu0
    %v407 = vadd.f32 0.0, %v406
    %408 = vdwg.mxu0
    %409 = vmatprep.subr.bf16.mxu0 %v275
    %410 = vmatpush1.bf16.msra.mxu0 %v274
    %411 = vmatprep.subr.bf16.mxu0 %v279
    %412 = vmatpush1.bf16.msra.mxu0 %v278
    %413 = vmatprep.subr.bf16.mxu0 %v283
    %414 = vmatpush1.bf16.msra.mxu0 %v282
    %415 = vmatprep.subr.bf16.mxu0 %v287
    %416 = vmatpush1.bf16.msra.mxu0 %v286
    %417 = vmatprep.subr.bf16.mxu0 %v291
    %418 = vmatpush1.bf16.msra.mxu0 %v290
    %419 = vmatprep.subr.bf16.mxu0 %v295
    %420 = vmatpush1.bf16.msra.mxu0 %v294
    %421 = vmatprep.subr.bf16.mxu0 %v299
    %422 = vmatpush1.bf16.msra.mxu0 %v298
    %423 = vmatprep.subr.bf16.mxu0 %v303
    %424 = vmatpush1.bf16.msra.mxu0 %v302
    %425 = vmatprep.subr.bf16.mxu0 0
    %426 = vmatpush1.bf16.msra.mxu0 0
    %427 = vmatprep.subr.bf16.mxu0 0
    %428 = vmatpush1.bf16.msra.mxu0 0
    %429 = vmatprep.subr.bf16.mxu0 0
    %430 = vmatpush1.bf16.msra.mxu0 0
    %431 = vmatprep.subr.bf16.mxu0 0
    %432 = vmatpush1.bf16.msra.mxu0 0
    %433 = vmatprep.subr.bf16.mxu0 0
    %434 = vmatpush1.bf16.msra.mxu0 0
    %435 = vmatprep.subr.bf16.mxu0 0
    %436 = vmatpush1.bf16.msra.mxu0 0
    %437 = vmatprep.subr.bf16.mxu0 0
    %438 = vmatpush1.bf16.msra.mxu0 0
    %439 = vmatprep.subr.bf16.mxu0 0
    %440 = vmatpush1.bf16.msra.mxu0 0
    %441 = vmatprep.mubr.bf16.mxu0 0
    %442 = vmatmul.mubr.bf16.gmra.mrb[0].mxu0 %v168
    %v443 = vpop.f32.mrb[0].mxu0
    %v444 = vadd.f32 0.0, %v443
    %v445 = vpop.f32.mrb[0].mxu0
    %v446 = vadd.f32 0.0, %v445
    %v447 = vpop.f32.mrb[0].mxu0
    %v448 = vadd.f32 0.0, %v447
    %v449 = vpop.f32.mrb[0].mxu0
    %v450 = vadd.f32 0.0, %v449
    %451 = vmatprep.mubr.bf16.mxu0 0
    %452 = vmatmul.mubr.bf16.gmra.mrb[0].mxu0 %v169
    %v453 = vpop.f32.mrb[0].mxu0
    %v454 = vadd.f32 0.0, %v453
    %v455 = vpop.f32.mrb[0].mxu0
    %v456 = vadd.f32 0.0, %v455
    %v457 = vpop.f32.mrb[0].mxu0
    %v458 = vadd.f32 0.0, %v457
    %v459 = vpop.f32.mrb[0].mxu0
    %v460 = vadd.f32 0.0, %v459
    %461 = vmatprep.mubr.bf16.mxu0 0
    %462 = vmatmul.mubr.bf16.gmra.mrb[0].mxu0 %v170
    %v463 = vpop.f32.mrb[0].mxu0
    %v464 = vadd.f32 0.0, %v463
    %v465 = vpop.f32.mrb[0].mxu0
    %v466 = vadd.f32 0.0, %v465
    %v467 = vpop.f32.mrb[0].mxu0
    %v468 = vadd.f32 0.0, %v467
    %v469 = vpop.f32.mrb[0].mxu0
    %v470 = vadd.f32 0.0, %v469
    %471 = vmatprep.mubr.bf16.mxu0 0
    %472 = vmatmul.mubr.bf16.gmra.mrb[0].mxu0 %v171
    %v473 = vpop.f32.mrb[0].mxu0
    %v474 = vadd.f32 0.0, %v473
    %v475 = vpop.f32.mrb[0].mxu0
    %v476 = vadd.f32 0.0, %v475
    %v477 = vpop.f32.mrb[0].mxu0
    %v478 = vadd.f32 0.0, %v477
    %v479 = vpop.f32.mrb[0].mxu0
    %v480 = vadd.f32 0.0, %v479
    %481 = vdwg.mxu0
    %v482 = vadd.f32 %v80, %v371
    %v483 = vadd.f32 %v81, %v373
    %v484 = vadd.f32 %v82, %v444
    %v485 = vadd.f32 %v83, %v446
    %v486 = vadd.f32 %v84, %v375
    %v487 = vadd.f32 %v85, %v377
    %v488 = vadd.f32 %v86, %v448
    %v489 = vadd.f32 %v87, %v450
    %v490 = vadd.f32 %v88, %v381
    %v491 = vadd.f32 %v89, %v383
    %v492 = vadd.f32 %v90, %v454
    %v493 = vadd.f32 %v91, %v456
    %v494 = vadd.f32 %v92, %v385
    %v495 = vadd.f32 %v93, %v387
    %v496 = vadd.f32 %v94, %v458
    %v497 = vadd.f32 %v95, %v460
    %v498 = vadd.f32 %v96, %v391
    %v499 = vadd.f32 %v97, %v393
    %v500 = vadd.f32 %v98, %v464
    %v501 = vadd.f32 %v99, %v466
    %v502 = vadd.f32 %v100, %v395
    %v503 = vadd.f32 %v101, %v397
    %v504 = vadd.f32 %v102, %v468
    %v505 = vadd.f32 %v103, %v470
    %v506 = vadd.f32 %v104, %v401
    %v507 = vadd.f32 %v105, %v403
    %v508 = vadd.f32 %v106, %v474
    %v509 = vadd.f32 %v107, %v476
    %v510 = vadd.f32 %v108, %v405
    %v511 = vadd.f32 %v109, %v407
    %v512 = vadd.f32 %v110, %v478
    %v513 = vadd.f32 %v111, %v480
    %514 = vst [vmem:[#allocation2] sm:$0xff] %v482
    %515 = vst [vmem:[#allocation2 + $0x8] sm:$0xff] %v483
    %516 = vst [vmem:[#allocation2 + $0x10] sm:$0xff] %v484
    %517 = vst [vmem:[#allocation2 + $0x18] sm:$0xff] %v485
    %518 = vst [vmem:[#allocation2 + $0x20] sm:$0xff] %v486
    %519 = vst [vmem:[#allocation2 + $0x28] sm:$0xff] %v487
    %520 = vst [vmem:[#allocation2 + $0x30] sm:$0xff] %v488
    %521 = vst [vmem:[#allocation2 + $0x38] sm:$0xff] %v489
    %522 = vst [vmem:[#allocation2 + $0x40] sm:$0xff] %v490
    %523 = vst [vmem:[#allocation2 + $0x48] sm:$0xff] %v491
    %524 = vst [vmem:[#allocation2 + $0x50] sm:$0xff] %v492
    %525 = vst [vmem:[#allocation2 + $0x58] sm:$0xff] %v493
    %526 = vst [vmem:[#allocation2 + $0x60] sm:$0xff] %v494
    %527 = vst [vmem:[#allocation2 + $0x68] sm:$0xff] %v495
    %528 = vst [vmem:[#allocation2 + $0x70] sm:$0xff] %v496
    %529 = vst [vmem:[#allocation2 + $0x78] sm:$0xff] %v497
    %530 = vst [vmem:[#allocation2 + $0x80] sm:$0xff] %v498
    %531 = vst [vmem:[#allocation2 + $0x88] sm:$0xff] %v499
    %532 = vst [vmem:[#allocation2 + $0x90] sm:$0xff] %v500
    %533 = vst [vmem:[#allocation2 + $0x98] sm:$0xff] %v501
    %534 = vst [vmem:[#allocation2 + $0xa0] sm:$0xff] %v502
    %535 = vst [vmem:[#allocation2 + $0xa8] sm:$0xff] %v503
    %536 = vst [vmem:[#allocation2 + $0xb0] sm:$0xff] %v504
    %537 = vst [vmem:[#allocation2 + $0xb8] sm:$0xff] %v505
    %538 = vst [vmem:[#allocation2 + $0xc0] sm:$0xff] %v506
    %539 = vst [vmem:[#allocation2 + $0xc8] sm:$0xff] %v507
    %540 = vst [vmem:[#allocation2 + $0xd0] sm:$0xff] %v508
    %541 = vst [vmem:[#allocation2 + $0xd8] sm:$0xff] %v509
    %542 = vst [vmem:[#allocation2 + $0xe0] sm:$0xff] %v510
    %543 = vst [vmem:[#allocation2 + $0xe8] sm:$0xff] %v511
    %544 = vst [vmem:[#allocation2 + $0xf0] sm:$0xff] %v512
    %545 = vst [vmem:[#allocation2 + $0xf8] sm:$0xff] %v513
    // Predicated region
    $region26: #{tpu_custom_call.1} parent=1 // pred_check
      %p546 = pneg %p44
    $region27: #{tpu_custom_call.1} parent=1 // pred_check_branch
      %548 = sbr.rel (%p546) target = $region29
    $region28: #{tpu_custom_call.1} parent=1 // pred_region
      %v549 = vld [vmem:[#allocation2] sm:$0xff]
      %v550 = vld [vmem:[#allocation2 + $0x8] sm:$0xff]
      %v551 = vld [vmem:[#allocation2 + $0x10] sm:$0xff]
      %v552 = vld [vmem:[#allocation2 + $0x18] sm:$0xff]
      %v553 = vld [vmem:[#allocation2 + $0x20] sm:$0xff]
      %v554 = vld [vmem:[#allocation2 + $0x28] sm:$0xff]
      %v555 = vld [vmem:[#allocation2 + $0x30] sm:$0xff]
      %v556 = vld [vmem:[#allocation2 + $0x38] sm:$0xff]
      %v557 = vld [vmem:[#allocation2 + $0x40] sm:$0xff]
      %v558 = vld [vmem:[#allocation2 + $0x48] sm:$0xff]
      %v559 = vld [vmem:[#allocation2 + $0x50] sm:$0xff]
      %v560 = vld [vmem:[#allocation2 + $0x58] sm:$0xff]
      %v561 = vld [vmem:[#allocation2 + $0x60] sm:$0xff]
      %v562 = vld [vmem:[#allocation2 + $0x68] sm:$0xff]
      %v563 = vld [vmem:[#allocation2 + $0x70] sm:$0xff]
      %v564 = vld [vmem:[#allocation2 + $0x78] sm:$0xff]
      %v565 = vld [vmem:[#allocation2 + $0x80] sm:$0xff]
      %v566 = vld [vmem:[#allocation2 + $0x88] sm:$0xff]
      %v567 = vld [vmem:[#allocation2 + $0x90] sm:$0xff]
      %v568 = vld [vmem:[#allocation2 + $0x98] sm:$0xff]
      %v569 = vld [vmem:[#allocation2 + $0xa0] sm:$0xff]
      %v570 = vld [vmem:[#allocation2 + $0xa8] sm:$0xff]
      %v571 = vld [vmem:[#allocation2 + $0xb0] sm:$0xff]
      %v572 = vld [vmem:[#allocation2 + $0xb8] sm:$0xff]
      %v573 = vld [vmem:[#allocation2 + $0xc0] sm:$0xff]
      %v574 = vld [vmem:[#allocation2 + $0xc8] sm:$0xff]
      %v575 = vld [vmem:[#allocation2 + $0xd0] sm:$0xff]
      %v576 = vld [vmem:[#allocation2 + $0xd8] sm:$0xff]
      %v577 = vld [vmem:[#allocation2 + $0xe0] sm:$0xff]
      %v578 = vld [vmem:[#allocation2 + $0xe8] sm:$0xff]
      %v579 = vld [vmem:[#allocation2 + $0xf0] sm:$0xff]
      %v580 = vld [vmem:[#allocation2 + $0xf8] sm:$0xff]
      %v581 = vld [vmem:[%s2] sm:$0xf]
      %v583 = vlaneseq
      %v584 = vshrl.u32 %v583, 7
      %v585 = vsub.s32 0, %v584
      %v586 = vrot.slane %v581, %v585
      %v587 = vlaneseq
      %v588 = vshrl.u32 %v587, 7
      %v589 = vsub.s32 1, %v588
      %v590 = vrot.slane %v581, %v589
      %v591 = vlaneseq
      %v592 = vshrl.u32 %v591, 7
      %v593 = vsub.s32 2, %v592
      %v594 = vrot.slane %v581, %v593
      %v595 = vlaneseq
      %v596 = vshrl.u32 %v595, 7
      %v597 = vsub.s32 3, %v596
      %v598 = vrot.slane %v581, %v597
      %v603 = vadd.f32 %v549, %v586
      %v604 = vadd.f32 %v550, %v590
      %v605 = vadd.f32 %v551, %v594
      %v606 = vadd.f32 %v552, %v598
      %v607 = vadd.f32 %v553, %v586
      %v608 = vadd.f32 %v554, %v590
      %v609 = vadd.f32 %v555, %v594
      %v610 = vadd.f32 %v556, %v598
      %v611 = vadd.f32 %v557, %v586
      %v612 = vadd.f32 %v558, %v590
      %v613 = vadd.f32 %v559, %v594
      %v614 = vadd.f32 %v560, %v598
      %v615 = vadd.f32 %v561, %v586
      %v616 = vadd.f32 %v562, %v590
      %v617 = vadd.f32 %v563, %v594
      %v618 = vadd.f32 %v564, %v598
      %v619 = vadd.f32 %v565, %v586
      %v620 = vadd.f32 %v566, %v590
      %v621 = vadd.f32 %v567, %v594
      %v622 = vadd.f32 %v568, %v598
      %v623 = vadd.f32 %v569, %v586
      %v624 = vadd.f32 %v570, %v590
      %v625 = vadd.f32 %v571, %v594
      %v626 = vadd.f32 %v572, %v598
      %v627 = vadd.f32 %v573, %v586
      %v628 = vadd.f32 %v574, %v590
      %v629 = vadd.f32 %v575, %v594
      %v630 = vadd.f32 %v576, %v598
      %v631 = vadd.f32 %v577, %v586
      %v632 = vadd.f32 %v578, %v590
      %v633 = vadd.f32 %v579, %v594
      %v634 = vadd.f32 %v580, %v598
      %v635 = vpack.c.bf16 %v607, %v603
      %v636 = vpack.c.bf16 %v608, %v604
      %v637 = vpack.c.bf16 %v609, %v605
      %v638 = vpack.c.bf16 %v610, %v606
      %v639 = vpack.c.bf16 %v615, %v611
      %v640 = vpack.c.bf16 %v616, %v612
      %v641 = vpack.c.bf16 %v617, %v613
      %v642 = vpack.c.bf16 %v618, %v614
      %v643 = vpack.c.bf16 %v623, %v619
      %v644 = vpack.c.bf16 %v624, %v620
      %v645 = vpack.c.bf16 %v625, %v621
      %v646 = vpack.c.bf16 %v626, %v622
      %v647 = vpack.c.bf16 %v631, %v627
      %v648 = vpack.c.bf16 %v632, %v628
      %v649 = vpack.c.bf16 %v633, %v629
      %v650 = vpack.c.bf16 %v634, %v630
      %v667 = vunpack.c.l.b16 %v635
      %v668 = vunpack.c.l.b16 %v636
      %v669 = vunpack.c.l.b16 %v637
      %v670 = vunpack.c.l.b16 %v638
      %v671 = vunpack.c.h.b16 %v635
      %v672 = vunpack.c.h.b16 %v636
      %v673 = vunpack.c.h.b16 %v637
      %v674 = vunpack.c.h.b16 %v638
      %v675 = vunpack.c.l.b16 %v639
      %v676 = vunpack.c.l.b16 %v640
      %v677 = vunpack.c.l.b16 %v641
      %v678 = vunpack.c.l.b16 %v642
      %v679 = vunpack.c.h.b16 %v639
      %v680 = vunpack.c.h.b16 %v640
      %v681 = vunpack.c.h.b16 %v641
      %v682 = vunpack.c.h.b16 %v642
      %v683 = vunpack.c.l.b16 %v643
      %v684 = vunpack.c.l.b16 %v644
      %v685 = vunpack.c.l.b16 %v645
      %v686 = vunpack.c.l.b16 %v646
      %v687 = vunpack.c.h.b16 %v643
      %v688 = vunpack.c.h.b16 %v644
      %v689 = vunpack.c.h.b16 %v645
      %v690 = vunpack.c.h.b16 %v646
      %v691 = vunpack.c.l.b16 %v647
      %v692 = vunpack.c.l.b16 %v648
      %v693 = vunpack.c.l.b16 %v649
      %v694 = vunpack.c.l.b16 %v650
      %v695 = vunpack.c.h.b16 %v647
      %v696 = vunpack.c.h.b16 %v648
      %v697 = vunpack.c.h.b16 %v649
      %v698 = vunpack.c.h.b16 %v650
      %v699 = vpack.c.b16 %v668, %v667
      %v700 = vpack.c.b16 %v670, %v669
      %v701 = vpack.c.b16 %v672, %v671
      %v702 = vpack.c.b16 %v674, %v673
      %v703 = vpack.c.b16 %v676, %v675
      %v704 = vpack.c.b16 %v678, %v677
      %v705 = vpack.c.b16 %v680, %v679
      %v706 = vpack.c.b16 %v682, %v681
      %v707 = vpack.c.b16 %v684, %v683
      %v708 = vpack.c.b16 %v686, %v685
      %v709 = vpack.c.b16 %v688, %v687
      %v710 = vpack.c.b16 %v690, %v689
      %v711 = vpack.c.b16 %v692, %v691
      %v712 = vpack.c.b16 %v694, %v693
      %v713 = vpack.c.b16 %v696, %v695
      %v714 = vpack.c.b16 %v698, %v697
      %731 = vst [vmem:[#allocation8] sm:$0xff] %v699
      %732 = vst [vmem:[#allocation8 + $0x8] sm:$0xff] %v700
      %733 = vst [vmem:[#allocation8 + $0x10] sm:$0xff] %v701
      %734 = vst [vmem:[#allocation8 + $0x18] sm:$0xff] %v702
      %735 = vst [vmem:[#allocation8 + $0x20] sm:$0xff] %v703
      %736 = vst [vmem:[#allocation8 + $0x28] sm:$0xff] %v704
      %737 = vst [vmem:[#allocation8 + $0x30] sm:$0xff] %v705
      %738 = vst [vmem:[#allocation8 + $0x38] sm:$0xff] %v706
      %739 = vst [vmem:[#allocation8 + $0x40] sm:$0xff] %v707
      %740 = vst [vmem:[#allocation8 + $0x48] sm:$0xff] %v708
      %741 = vst [vmem:[#allocation8 + $0x50] sm:$0xff] %v709
      %742 = vst [vmem:[#allocation8 + $0x58] sm:$0xff] %v710
      %743 = vst [vmem:[#allocation8 + $0x60] sm:$0xff] %v711
      %744 = vst [vmem:[#allocation8 + $0x68] sm:$0xff] %v712
      %745 = vst [vmem:[#allocation8 + $0x70] sm:$0xff] %v713
      %746 = vst [vmem:[#allocation8 + $0x78] sm:$0xff] %v714
    $region29: #{tpu_custom_call.1} parent=1 // pred_fallthru
      _
    // Predicated region
    $region30: #{tpu_custom_call.1} parent=1 // pred_check
      _
    $region31: #{tpu_custom_call.1} parent=1 // pred_check_branch
      %748 = sbr.rel (0) target = $region33
    $region32: #{tpu_custom_call.1} parent=1 // pred_region
      %s750 = ssub.s32 2048, 2048
      %751 = vsyncadd [#allocation5], %s750
      %s752 = sshll.u32 [#allocation8], 4
      %s753 = int_to_ptr.vmem [resolvable:$true] %s752
      %758 = dma.vmem_to_hbm [thread:$0]  %s753, 2048, %s3, [#allocation5], 256, 256, 16
    $region33: #{tpu_custom_call.1} parent=1 // pred_fallthru
      _
    // Predicated region
    $region34: #{tpu_custom_call.1} parent=1 // pred_check
      _
    $region35: #{tpu_custom_call.1} parent=1 // pred_check_branch
      %760 = sbr.rel (0) target = $region37
    $region36: #{tpu_custom_call.1} parent=1 // pred_region
      %761 = dma.done [#allocation5], 2048
    $region37: #{tpu_custom_call.1} parent=1 // pred_fallthru
      _
    %762 = vsyncpa [#allocation4], 1
    %763 = vsyncpa [#allocation7], 1
    %764 = vsyncpa [#allocation5], 1

</llo_original>
